<compile_context>
chip_gen: v7x
topology: tpu7x:2x2x1
jax: 0.10.0
libtpu: 0.0.40
codegen_flags: <defaults>
</compile_context>

<pallas_src>
import functools
import math

import jax
import jax.numpy as jnp
from jax.experimental import pallas as pl
from jax.experimental.pallas import tpu as pltpu

_LANES = 512  # lane-dense working width (multiple of 128)


def _round_up(x, m):
    return -(-x // m) * m


def _pack_rows(dtype):
    # sublane packing multiple: 8 rows for 4-byte, 16 for 2-byte, 32 for 1-byte
    return max(8, 32 // jnp.dtype(dtype).itemsize)


def _coeffs(s, p, d, eps):
    """Scalar coefficients (a, b) so that out = a*p_bnd + b*p_max reproduces
    every branch of the torch forward. Works on rank-0 f32 values both inside
    a kernel and in the wrapper."""
    one = jnp.float32(1.0)
    zero = jnp.float32(0.0)
    # torch.isclose(S, D, atol=1e-4): |S - D| <= atol + rtol*|D|, rtol=1e-5
    close = jnp.abs(s - d) <= (1e-4 + 1e-5 * jnp.abs(d))
    shortfall = d - s
    total_slack = (p - s) + eps          # == sum(p_max - p_bnd) + eps
    alpha = shortfall / total_slack
    total_bnd = s + eps
    beta = (s - d) / total_bnd
    saturated = total_slack < shortfall  # shortage that cannot be covered -> p_max
    a_short = jnp.where(saturated, zero, one - alpha)
    b_short = jnp.where(saturated, one, alpha)
    degenerate = total_bnd < eps         # surplus with ~zero bounded mass -> zeros
    a_sur = jnp.where(degenerate, zero, one - beta)
    short = s < d
    a = jnp.where(close, one, jnp.where(short, a_short, a_sur))
    b = jnp.where(close, zero, jnp.where(short, b_short, zero))
    return a, b


# ----------------------------------------------------------------------------
# Fused single-pass kernel (whole working set resident in VMEM)
# ----------------------------------------------------------------------------
def _fused_kernel(d_ref, p_hat_ref, p_max_ref, out_ref, *, eps):
    pm = p_max_ref[...].astype(jnp.float32)
    pb = pm * jax.nn.sigmoid(p_hat_ref[...].astype(jnp.float32))
    a, b = _coeffs(jnp.sum(pb), jnp.sum(pm), d_ref[0], eps)
    out_ref[...] = (a * pb + b * pm).astype(out_ref.dtype)


# ----------------------------------------------------------------------------
# Phase 1: tiled reduction -> per-core partials of S = sum(p_bnd), P = sum(p_max)
# ----------------------------------------------------------------------------
def _reduce_kernel(p_hat_ref, p_max_ref, s_ref, psum_ref):
    @pl.when(pl.program_id(1) == 0)
    def _():
        s_ref[...] = jnp.zeros_like(s_ref)
        psum_ref[...] = jnp.zeros_like(psum_ref)

    pm = p_max_ref[...].astype(jnp.float32)
    pb = pm * jax.nn.sigmoid(p_hat_ref[...].astype(jnp.float32))
    s_ref[...] += jnp.sum(pb)       # broadcast the per-core partial over the block
    psum_ref[...] += jnp.sum(pm)


# ----------------------------------------------------------------------------
# Phase 2: tiled apply -> out = A * p_bnd + B * p_max (A, B from SMEM scalars)
# ----------------------------------------------------------------------------
def _apply_kernel(ab_ref, p_hat_ref, p_max_ref, out_ref):
    a = ab_ref[0]
    b = ab_ref[1]
    pm = p_max_ref[...].astype(jnp.float32)
    pb = pm * jax.nn.sigmoid(p_hat_ref[...].astype(jnp.float32))
    out_ref[...] = (a * pb + b * pm).astype(out_ref.dtype)


# ----------------------------------------------------------------------------
# Wrapper
# ----------------------------------------------------------------------------
def proportional_completion(p_hat, p_max, total_demand, eps=1e-8,
                            row_tile=None, fused=None):
    """Pallas forward of ProportionalCompletionLayer for arbitrary-shape inputs."""
    assert p_hat.shape == p_max.shape
    p_max = p_max.astype(p_hat.dtype)
    orig_shape = p_hat.shape
    out_dtype = p_hat.dtype
    total = int(math.prod(orig_shape)) if orig_shape else 1
    isz = jnp.dtype(p_hat.dtype).itemsize
    osz = jnp.dtype(out_dtype).itemsize
    pack = _pack_rows(p_hat.dtype)

    d = jnp.reshape(jnp.asarray(total_demand, jnp.float32), (1,))

    rows_needed = _round_up(max(1, _round_up(total, _LANES) // _LANES), pack)
    fused_bytes = rows_needed * _LANES * (2 * isz + osz)
    if fused is None:
        fused = fused_bytes <= (12 << 20)   # fits comfortably in VMEM on all gens

    if fused:
        rows = rows_needed
        tm = rows
        num_tiles = 1
    else:
        if row_tile is None:
            # ~4 MiB input tiles; keep >= 4 tiles for megacore load balance on v7x
            target_rows = max(pack, _round_up((4 << 20) // (_LANES * isz), pack))
            tm = max(pack, min(target_rows, _round_up(-(-rows_needed // 4), pack)))
        else:
            tm = max(pack, _round_up(row_tile, pack))
        rows = _round_up(rows_needed, 2 * tm)   # even tile count for the 2-way split
        num_tiles = rows // tm

    padded_total = rows * _LANES

    # ---- flatten to a lane-dense (rows, 512) slab --------------------------
    ph = jnp.ravel(p_hat)
    pm = jnp.ravel(p_max)
    if padded_total != total:
        # TODO(synk): padding copies the whole array for ragged sizes; a masked
        # remainder tile would avoid this extra HBM pass for huge ragged inputs.
        ph = jnp.pad(ph, (0, padded_total - total))
        pm = jnp.pad(pm, (0, padded_total - total))   # zeros are inert
    ph = ph.reshape(rows, _LANES)
    pm = pm.reshape(rows, _LANES)

    if fused:
        vmem_limit = int(min(max(2 * fused_bytes + (4 << 20), 16 << 20), 56 << 20))
        out = pl.pallas_call(
            functools.partial(_fused_kernel, eps=eps),
            out_shape=jax.ShapeDtypeStruct((rows, _LANES), out_dtype),
            grid=(1,),
            in_specs=[pl.BlockSpec(memory_space=pltpu.MemorySpace.SMEM),  # D
                      pl.BlockSpec((rows, _LANES), lambda i: (0, 0)),
                      pl.BlockSpec((rows, _LANES), lambda i: (0, 0))],
            out_specs=pl.BlockSpec((rows, _LANES), lambda i: (0, 0)),
            compiler_params=pltpu.CompilerParams(vmem_limit_bytes=vmem_limit),
        )(d, ph, pm)
    else:
        tile_in = tm * _LANES * isz
        tile_out = tm * _LANES * osz
        vmem_limit = int(min(max(4 * tile_in + 2 * tile_out + (4 << 20), 16 << 20),
                             56 << 20))
        half = num_tiles // 2

        # ---- phase 1: streaming reduction, 2-way split across TensorCores --
        s_parts, p_parts = pl.pallas_call(
            _reduce_kernel,
            out_shape=(jax.ShapeDtypeStruct((2, 8, 128), jnp.float32),
                       jax.ShapeDtypeStruct((2, 8, 128), jnp.float32)),
            grid=(2, half),
            in_specs=[pl.BlockSpec((tm, _LANES), lambda c, j: (c * half + j, 0)),
                      pl.BlockSpec((tm, _LANES), lambda c, j: (c * half + j, 0))],
            out_specs=(pl.BlockSpec((1, 8, 128), lambda c, j: (c, 0, 0)),
                       pl.BlockSpec((1, 8, 128), lambda c, j: (c, 0, 0))),
            compiler_params=pltpu.CompilerParams(
                dimension_semantics=("parallel", "arbitrary"),
                vmem_limit_bytes=vmem_limit),
        )(ph, pm)

        # combine the two per-core partials and hoist all branch math here
        s = s_parts[0, 0, 0] + s_parts[1, 0, 0]
        p = p_parts[0, 0, 0] + p_parts[1, 0, 0]
        a, b = _coeffs(s, p, d[0], eps)
        ab = jnp.stack([a, b]).astype(jnp.float32)   # two scalar coefficients

        # ---- phase 2: streaming apply (sigmoid + FMA + lane-dense store) ---
        out = pl.pallas_call(
            _apply_kernel,
            out_shape=jax.ShapeDtypeStruct((rows, _LANES), out_dtype),
            grid=(num_tiles,),
            in_specs=[pl.BlockSpec(memory_space=pltpu.MemorySpace.SMEM),  # A, B
                      pl.BlockSpec((tm, _LANES), lambda i: (i, 0)),
                      pl.BlockSpec((tm, _LANES), lambda i: (i, 0))],
            out_specs=pl.BlockSpec((tm, _LANES), lambda i: (i, 0)),
            compiler_params=pltpu.CompilerParams(
                dimension_semantics=("parallel",),
                vmem_limit_bytes=vmem_limit),
        )(ab, ph, pm)

    out = out.reshape(-1)
    if padded_total != total:
        out = out[:total]
    return out.reshape(orig_shape)


# ----------------------------------------------------------------------------
# Pure-JAX reference mirroring the torch forward (for verification)
# ----------------------------------------------------------------------------
def _reference(p_hat, p_max, total_demand, eps=1e-8):
    p_bnd = p_max * jax.nn.sigmoid(p_hat)
    S = jnp.sum(p_bnd)
    D = jnp.asarray(total_demand, jnp.float32).reshape(())
    close = jnp.abs(S - D) <= (1e-4 + 1e-5 * jnp.abs(D))
    shortfall = D - S
    slack = p_max - p_bnd
    total_slack = jnp.sum(slack) + eps
    short_out = jnp.where(total_slack < shortfall, p_max,
                          p_bnd + (shortfall / total_slack) * slack)
    surplus = S - D
    total_bnd = S + eps
    surplus_out = jnp.where(total_bnd < eps, jnp.zeros_like(p_bnd),
                            (1.0 - surplus / total_bnd) * p_bnd)
    return jnp.where(close, p_bnd, jnp.where(S < D, short_out, surplus_out))


if __name__ == "__main__":
    key = jax.random.PRNGKey(0)
    k1, k2 = jax.random.split(key)

    # Small module-like shape (fused single-pass path).
    M, N = 8, 128
    p_hat = jax.random.normal(k1, (M, N), dtype=jnp.float32)
    p_max = jnp.abs(jax.random.normal(k2, (M, N), dtype=jnp.float32)) + 0.1

    # shortage branch (S < D, not saturated)
    d1 = jnp.float32(0.9) * jnp.sum(p_max)
    out1 = jax.block_until_ready(proportional_completion(p_hat, p_max, d1))
    assert out1.shape == (M, N) and out1.dtype == p_hat.dtype
    assert jnp.allclose(out1, _reference(p_hat, p_max, d1), atol=1e-5, rtol=1e-5)

    # surplus branch (S > D)
    d2 = jnp.float32(1.0)
    out2 = jax.block_until_ready(proportional_completion(p_hat, p_max, d2))
    assert jnp.allclose(out2, _reference(p_hat, p_max, d2), atol=1e-5, rtol=1e-5)

    # saturated shortage branch (total_slack < shortfall -> p_max)
    d3 = jnp.float32(2.0) * jnp.sum(p_max)
    out3 = jax.block_until_ready(proportional_completion(p_hat, p_max, d3))
    assert jnp.allclose(out3, _reference(p_hat, p_max, d3), atol=1e-5, rtol=1e-5)

    # non-lane-aligned shape -> wrapper pads/reshapes to a lane-dense slab
    M3, N3 = 6, 50
    ph3 = jax.random.normal(k1, (M3, N3), dtype=jnp.float32)
    pm3 = jnp.abs(jax.random.normal(k2, (M3, N3), dtype=jnp.float32)) + 0.1
    d5 = jnp.float32(0.7) * jnp.sum(pm3)
    out5 = jax.block_until_ready(proportional_completion(ph3, pm3, d5))
    assert out5.shape == (M3, N3)
    assert jnp.allclose(out5, _reference(ph3, pm3, d5), atol=1e-5, rtol=1e-5)

    # force the two-phase streaming path (multi-tile, 2-way split reduction)
    M2, N2 = 64, 256
    ph2 = jax.random.normal(k1, (M2, N2), dtype=jnp.float32)
    pm2 = jnp.abs(jax.random.normal(k2, (M2, N2), dtype=jnp.float32)) + 0.1
    d4 = jnp.float32(0.5) * jnp.sum(pm2)
    out4 = jax.block_until_ready(
        proportional_completion(ph2, pm2, d4, fused=False, row_tile=8))
    assert jnp.allclose(out4, _reference(ph2, pm2, d4), atol=1e-5, rtol=1e-5)

    print("KERNEL_OK")
</pallas_src>

<mosaic_0001>
module attributes {stable_mosaic.version = 11 : i64} {
  func.func @_fused_kernel(%arg0: i32, %arg1: memref<1xf32, #tpu.memory_space<smem>>, %arg2: memref<8x512xf32, #tpu.memory_space<vmem>>, %arg3: memref<8x512xf32, #tpu.memory_space<vmem>>, %arg4: memref<8x512xf32, #tpu.memory_space<vmem>>) attributes {dimension_semantics = [#tpu.dimension_semantics<arbitrary>], iteration_bounds = array<i64: 1>, scalar_prefetch = 0 : i64, scratch_operands = 0 : i64, tpu.core_type = #tpu.core_type<tc>, window_params = [{transform_indices = @transform_0, window_bounds = array<i64: 1>}, {pipeline_mode = #tpu.pipeline_mode<synchronous>, transform_indices = @transform_1, window_bounds = array<i64: 8, 512>}, {pipeline_mode = #tpu.pipeline_mode<synchronous>, transform_indices = @transform_2, window_bounds = array<i64: 8, 512>}, {pipeline_mode = #tpu.pipeline_mode<synchronous>, transform_indices = @transform_3, window_bounds = array<i64: 8, 512>}]} {
    %c0 = arith.constant 0 : index
    %c0_0 = arith.constant 0 : index
    %0 = vector.load %arg3[%c0, %c0_0] : memref<8x512xf32, #tpu.memory_space<vmem>>, vector<8x512xf32>
    %c0_1 = arith.constant 0 : index
    %c0_2 = arith.constant 0 : index
    %1 = vector.load %arg2[%c0_1, %c0_2] : memref<8x512xf32, #tpu.memory_space<vmem>>, vector<8x512xf32>
    %2 = arith.negf %1 : vector<8x512xf32>
    %3 = math.exp %2 : vector<8x512xf32>
    %cst = arith.constant 1.000000e+00 : f32
    %4 = vector.broadcast %cst : f32 to vector<8x512xf32>
    %5 = arith.addf %4, %3 : vector<8x512xf32>
    %6 = arith.divf %4, %5 : vector<8x512xf32>
    %7 = arith.mulf %0, %6 : vector<8x512xf32>
    %8 = vector.shape_cast %7 : vector<8x512xf32> to vector<1x8x512xf32>
    %cst_3 = arith.constant dense<0.000000e+00> : vector<1xf32>
    %9 = vector.multi_reduction <add>, %8, %cst_3 [1, 2] : vector<1x8x512xf32> to vector<1xf32>
    %10 = vector.shape_cast %9 : vector<1xf32> to vector<1x1x1xf32>
    %11 = vector.extract %10[0, 0, 0] : f32 from vector<1x1x1xf32>
    %12 = vector.shape_cast %0 : vector<8x512xf32> to vector<1x8x512xf32>
    %cst_4 = arith.constant dense<0.000000e+00> : vector<1xf32>
    %13 = vector.multi_reduction <add>, %12, %cst_4 [1, 2] : vector<1x8x512xf32> to vector<1xf32>
    %14 = vector.shape_cast %13 : vector<1xf32> to vector<1x1x1xf32>
    %15 = vector.extract %14[0, 0, 0] : f32 from vector<1x1x1xf32>
    %c0_5 = arith.constant 0 : index
    %16 = memref.load %arg1[%c0_5] : memref<1xf32, #tpu.memory_space<smem>>
    %17 = arith.subf %11, %16 : f32
    %18 = math.absf %17 : f32
    %19 = math.absf %16 : f32
    %cst_6 = arith.constant 9.99999974E-6 : f32
    %20 = arith.mulf %cst_6, %19 : f32
    %cst_7 = arith.constant 9.99999974E-5 : f32
    %21 = arith.addf %cst_7, %20 : f32
    %22 = arith.cmpf ole, %18, %21 : f32
    %23 = arith.subf %16, %11 : f32
    %24 = arith.subf %15, %11 : f32
    %cst_8 = arith.constant 9.99999993E-9 : f32
    %25 = arith.addf %24, %cst_8 : f32
    %26 = arith.divf %23, %25 : f32
    %cst_9 = arith.constant 9.99999993E-9 : f32
    %27 = arith.addf %11, %cst_9 : f32
    %28 = arith.subf %11, %16 : f32
    %29 = arith.divf %28, %27 : f32
    %30 = arith.cmpf olt, %25, %23 : f32
    %cst_10 = arith.constant 1.000000e+00 : f32
    %31 = arith.subf %cst_10, %26 : f32
    %cst_11 = arith.constant 0.000000e+00 : f32
    %32 = arith.select %30, %cst_11, %31 : f32
    %cst_12 = arith.constant 1.000000e+00 : f32
    %33 = arith.select %30, %cst_12, %26 : f32
    %cst_13 = arith.constant 9.99999993E-9 : f32
    %34 = arith.cmpf olt, %27, %cst_13 : f32
    %cst_14 = arith.constant 1.000000e+00 : f32
    %35 = arith.subf %cst_14, %29 : f32
    %cst_15 = arith.constant 0.000000e+00 : f32
    %36 = arith.select %34, %cst_15, %35 : f32
    %37 = arith.cmpf olt, %11, %16 : f32
    %38 = arith.select %37, %32, %36 : f32
    %cst_16 = arith.constant 1.000000e+00 : f32
    %39 = arith.select %22, %cst_16, %38 : f32
    %cst_17 = arith.constant 0.000000e+00 : f32
    %40 = arith.select %37, %33, %cst_17 : f32
    %cst_18 = arith.constant 0.000000e+00 : f32
    %41 = arith.select %22, %cst_18, %40 : f32
    %42 = vector.broadcast %39 : f32 to vector<8x512xf32>
    %43 = arith.mulf %42, %7 : vector<8x512xf32>
    %44 = vector.broadcast %41 : f32 to vector<8x512xf32>
    %45 = arith.mulf %44, %0 : vector<8x512xf32>
    %46 = arith.addf %43, %45 : vector<8x512xf32>
    %c0_19 = arith.constant 0 : index
    %c0_20 = arith.constant 0 : index
    %47 = vector.load %arg4[%c0_19, %c0_20] : memref<8x512xf32, #tpu.memory_space<vmem>>, vector<8x512xf32>
    tpu.vector_store %arg4[%c0_19, %c0_20], %46 {strides = array<i32>} : memref<8x512xf32, #tpu.memory_space<vmem>>, vector<8x512xf32>,
    return
  }
  func.func @transform_0(%arg0: i32) -> i32 {
    %c0_i32 = arith.constant 0 : i32
    %c0_i32_0 = arith.constant 0 : i32
    return %c0_i32 : i32
  }
  func.func @transform_1(%arg0: i32) -> (i32, i32) {
    %c0_i32 = arith.constant 0 : i32
    %c0_i32_0 = arith.constant 0 : i32
    %c0_i32_1 = arith.constant 0 : i32
    return %c0_i32, %c0_i32_0 : i32, i32
  }
  func.func @transform_2(%arg0: i32) -> (i32, i32) {
    %c0_i32 = arith.constant 0 : i32
    %c0_i32_0 = arith.constant 0 : i32
    %c0_i32_1 = arith.constant 0 : i32
    return %c0_i32, %c0_i32_0 : i32, i32
  }
  func.func @transform_3(%arg0: i32) -> (i32, i32) {
    %c0_i32 = arith.constant 0 : i32
    %c0_i32_0 = arith.constant 0 : i32
    %c0_i32_1 = arith.constant 0 : i32
    return %c0_i32, %c0_i32_0 : i32, i32
  }
}

</mosaic_0001>

<llo_original>
// kernel: tpu_custom_call.1
$region0: #{tpu_custom_call.1}
  #allocation0 [shape = 'u32[]', space=smem, size = 0x4, offset = 0x4, fixed_abs, tag = 'smem constant byte address 0x4 - core index']
  #allocation1 [shape = 'u32[144,128]{1,0:T(1,128)}', space=vmem, size = 0x12000, scoped, tag = 'internal scratch']
  #allocation2 [shape = 'f32[1]{0:T(128)S(6)}', space=smem, size = 0x200, scoped, tag = 'scoped memory for tpu_custom_call.1']
  %s0 = inlined_call_operand.<no memory space> [shape: f32[1], index: 0, kind: input, shape index: {}]
  %s1 = inlined_call_operand.hbm [shape: f32[8,512], index: 1, kind: input, shape index: {}]
  %s2 = inlined_call_operand.hbm [shape: f32[8,512], index: 2, kind: input, shape index: {}]
  %s3 = inlined_call_operand.hbm [shape: f32[8,512], index: 3, kind: output, shape index: {}]
  %s4 = sld [smem:[#allocation0]]
  $region30: #{tpu_custom_call.1} parent=0
    _
  %s6 = ssub.s32 1, %s4
  %s7 = scalar_select 0, %s6, %s4
  %8 = sst [smem:[#allocation2]] %s0
  $region1: #{tpu_custom_call.1} parent=0
    #allocation3 [shape = 'u8[16384]{0}', space=vmem, size = 0x4000, scoped, tag = 'input window, operand 1, single buffered']
    #allocation4 [shape = 's32[1]{0}', space=sflag, size = 0x4, scoped, tag = 'scoped memory for tpu_custom_call.1']
    #allocation5 [shape = 's32[1]{0}', space=sflag, size = 0x4, scoped, tag = 'scoped memory for tpu_custom_call.1']
    #allocation6 [shape = 'u8[16384]{0}', space=vmem, size = 0x4000, scoped, tag = 'input window, operand 2, single buffered']
    #allocation7 [shape = 's32[1]{0}', space=sflag, size = 0x4, scoped, tag = 'scoped memory for tpu_custom_call.1']
    #allocation8 [shape = 'u8[16384]{0}', space=vmem, size = 0x4000, scoped, tag = 'output window, operand 0, single buffered']
    %9 = vsyncpa [#allocation4], 0
    %10 = vsyncpa [#allocation7], 0
    %11 = vsyncpa [#allocation5], 0
    // Predicated region
    $region2: #{tpu_custom_call.1} parent=1 // pred_check
      _
    $region3: #{tpu_custom_call.1} parent=1 // pred_check_branch
      %13 = sbr.rel (0) target = $region5
    $region4: #{tpu_custom_call.1} parent=1 // pred_region
      _
    $region5: #{tpu_custom_call.1} parent=1 // pred_fallthru
      _
    // Predicated region
    $region6: #{tpu_custom_call.1} parent=1 // pred_check
      _
    $region7: #{tpu_custom_call.1} parent=1 // pred_check_branch
      %15 = sbr.rel (0) target = $region9
    $region8: #{tpu_custom_call.1} parent=1 // pred_region
      %s17 = ssub.s32 512, 512
      %18 = vsyncadd [#allocation4], %s17
      %s20 = sshll.u32 [#allocation3], 4
      %s21 = int_to_ptr.vmem [resolvable:$true] %s20
      %23 = dma.hbm_to_vmem [thread:$0]  %s1, 512, %s21, [#allocation4]
    $region9: #{tpu_custom_call.1} parent=1 // pred_fallthru
      _
    // Predicated region
    $region10: #{tpu_custom_call.1} parent=1 // pred_check
      _
    $region11: #{tpu_custom_call.1} parent=1 // pred_check_branch
      %25 = sbr.rel (0) target = $region13
    $region12: #{tpu_custom_call.1} parent=1 // pred_region
      %s27 = ssub.s32 512, 512
      %28 = vsyncadd [#allocation7], %s27
      %s30 = sshll.u32 [#allocation6], 4
      %s31 = int_to_ptr.vmem [resolvable:$true] %s30
      %33 = dma.hbm_to_vmem [thread:$0]  %s2, 512, %s31, [#allocation7]
    $region13: #{tpu_custom_call.1} parent=1 // pred_fallthru
      _
    // Predicated region
    $region14: #{tpu_custom_call.1} parent=1 // pred_check
      _
    $region15: #{tpu_custom_call.1} parent=1 // pred_check_branch
      %35 = sbr.rel (0) target = $region17
    $region16: #{tpu_custom_call.1} parent=1 // pred_region
      %36 = dma.done [#allocation4], 512
    $region17: #{tpu_custom_call.1} parent=1 // pred_fallthru
      _
    // Predicated region
    $region18: #{tpu_custom_call.1} parent=1 // pred_check
      _
    $region19: #{tpu_custom_call.1} parent=1 // pred_check_branch
      %38 = sbr.rel (0) target = $region21
    $region20: #{tpu_custom_call.1} parent=1 // pred_region
      %39 = dma.done [#allocation7], 512
    $region21: #{tpu_custom_call.1} parent=1 // pred_fallthru
      _
    %v40 = vld [vmem:[#allocation6] sm:$0xff]
    %v41 = vld [vmem:[#allocation6 + $0x8] sm:$0xff]
    %v42 = vld [vmem:[#allocation6 + $0x10] sm:$0xff]
    %v43 = vld [vmem:[#allocation6 + $0x18] sm:$0xff]
    %v44 = vld [vmem:[#allocation3] sm:$0xff]
    %v45 = vld [vmem:[#allocation3 + $0x8] sm:$0xff]
    %v46 = vld [vmem:[#allocation3 + $0x10] sm:$0xff]
    %v47 = vld [vmem:[#allocation3 + $0x18] sm:$0xff]
    %v48 = vxor.u32 %v44, 2147483648
    %v49 = vxor.u32 %v45, 2147483648
    %v50 = vxor.u32 %v46, 2147483648
    %v51 = vxor.u32 %v47, 2147483648
    %v52 = vmul.f32 %v48, 1.442695
    %v53 = vpow.pop %v52
    %v54 = vmul.f32 %v49, 1.442695
    %v55 = vpow.pop %v54
    %v56 = vmul.f32 %v50, 1.442695
    %v57 = vpow.pop %v56
    %v58 = vmul.f32 %v51, 1.442695
    %v59 = vpow.pop %v58
    %v60 = vadd.f32 %v53, 1.0
    %v61 = vadd.f32 %v55, 1.0
    %v62 = vadd.f32 %v57, 1.0
    %v63 = vadd.f32 %v59, 1.0
    %v64 = vrcp.pop %v60
    %v65 = vmul.f32 1.0, %v64
    %v66 = vrcp.pop %v61
    %v67 = vmul.f32 1.0, %v66
    %v68 = vrcp.pop %v62
    %v69 = vmul.f32 1.0, %v68
    %v70 = vrcp.pop %v63
    %v71 = vmul.f32 1.0, %v70
    %v72 = vmul.f32 %v40, %v65
    %v73 = vmul.f32 %v41, %v67
    %v74 = vmul.f32 %v42, %v69
    %v75 = vmul.f32 %v43, %v71
    %v76 = vadd.f32 %v72, %v73
    %v77 = vadd.f32 %v76, %v74
    %v78 = vadd.f32 %v77, %v75
    %79 = vadd.xlane.f32.xlu0 %v78
    %v80 = vpop.xlane.xlu0 %79
    %v81 = vrot.slane %v80, 4
    %v82 = vadd.f32 %v80, %v81
    %v83 = vrot.slane %v82, 2
    %v84 = vadd.f32 %v82, %v83
    %v85 = vrot.slane %v84, 1
    %v86 = vadd.f32 %v84, %v85
    %s87 = vtos %v86
    %v88 = vadd.f32 %v40, %v41
    %v89 = vadd.f32 %v88, %v42
    %v90 = vadd.f32 %v89, %v43
    %91 = vadd.xlane.f32.xlu0 %v90
    %v92 = vpop.xlane.xlu0 %91
    %v93 = vrot.slane %v92, 4
    %v94 = vadd.f32 %v92, %v93
    %v95 = vrot.slane %v94, 2
    %v96 = vadd.f32 %v94, %v95
    %v97 = vrot.slane %v96, 1
    %v98 = vadd.f32 %v96, %v97
    %s99 = vtos %v98
    %s100 = sld [smem:[#allocation2]]
    %s101 = ssub.f32 %s87, %s100
    %s102 = sand.u32 2147483647, %s101
    %s103 = sand.u32 2147483647, %s100
    %s104 = smul.f32 %s103, 1e-05
    %s105 = sadd.f32 %s104, 0.0001
    %p106 = scmp.le.f32.partialorder %s102, %s105
    %s107 = ssub.f32 %s100, %s87
    %s108 = ssub.f32 %s99, %s87
    %s109 = sadd.f32 %s108, 1e-08
    %v110 = vstv %s109
    %v111 = vrcp.pop %v110
    %s112 = vtos %v111
    %s113 = smul.f32 %s107, %s112
    %s114 = sadd.f32 %s87, 1e-08
    %v115 = vstv %s114
    %v116 = vrcp.pop %v115
    %s117 = vtos %v116
    %s118 = smul.f32 %s101, %s117
    %p119 = scmp.lt.f32.partialorder %s109, %s107
    %s120 = ssub.f32 1.0, %s113
    %s121 = scalar_select %p119, 0.0, %s120
    %s122 = scalar_select %p119, 1.0, %s113
    %p123 = scmp.lt.f32.partialorder %s114, 1e-08
    %s124 = ssub.f32 1.0, %s118
    %s125 = scalar_select %p123, 0.0, %s124
    %p126 = scmp.lt.f32.partialorder %s87, %s100
    %s127 = scalar_select %p126, %s121, %s125
    %s128 = scalar_select %p106, 1.0, %s127
    %s129 = scalar_select %p126, %s122, 0.0
    %s130 = scalar_select %p106, 0.0, %s129
    %v131 = vstv %s128
    %v132 = vmul.f32 %v131, %v72
    %v133 = vmul.f32 %v131, %v73
    %v134 = vmul.f32 %v131, %v74
    %v135 = vmul.f32 %v131, %v75
    %v136 = vstv %s130
    %v137 = vmul.f32 %v136, %v40
    %v138 = vmul.f32 %v136, %v41
    %v139 = vmul.f32 %v136, %v42
    %v140 = vmul.f32 %v136, %v43
    %v141 = vadd.f32 %v132, %v137
    %v142 = vadd.f32 %v133, %v138
    %v143 = vadd.f32 %v134, %v139
    %v144 = vadd.f32 %v135, %v140
    %145 = vst [vmem:[#allocation8] sm:$0xff] %v141
    %146 = vst [vmem:[#allocation8 + $0x8] sm:$0xff] %v142
    %147 = vst [vmem:[#allocation8 + $0x10] sm:$0xff] %v143
    %148 = vst [vmem:[#allocation8 + $0x18] sm:$0xff] %v144
    // Predicated region
    $region22: #{tpu_custom_call.1} parent=1 // pred_check
      _
    $region23: #{tpu_custom_call.1} parent=1 // pred_check_branch
      %150 = sbr.rel (0) target = $region25
    $region24: #{tpu_custom_call.1} parent=1 // pred_region
      %s152 = ssub.s32 512, 512
      %153 = vsyncadd [#allocation5], %s152
      %s155 = sshll.u32 [#allocation8], 4
      %s156 = int_to_ptr.vmem [resolvable:$true] %s155
      %158 = dma.vmem_to_hbm [thread:$0]  %s156, 512, %s3, [#allocation5]
    $region25: #{tpu_custom_call.1} parent=1 // pred_fallthru
      _
    // Predicated region
    $region26: #{tpu_custom_call.1} parent=1 // pred_check
      _
    $region27: #{tpu_custom_call.1} parent=1 // pred_check_branch
      %160 = sbr.rel (0) target = $region29
    $region28: #{tpu_custom_call.1} parent=1 // pred_region
      %161 = dma.done [#allocation5], 512
    $region29: #{tpu_custom_call.1} parent=1 // pred_fallthru
      _
    %162 = vsyncpa [#allocation4], 1
    %163 = vsyncpa [#allocation7], 1
    %164 = vsyncpa [#allocation5], 1

</llo_original>
